<compile_context>
chip_gen: v6e
topology: v6e:2x2x1
jax: 0.10.0
libtpu: 0.0.40
codegen_flags: <defaults>
</compile_context>

<pallas_src>
import functools

import jax
import jax.numpy as jnp
from jax.experimental import pallas as pl
from jax.experimental.pallas import tpu as pltpu


# ---------------------------------------------------------------------------
# Tile / VMEM configuration
# ---------------------------------------------------------------------------
_TM_TARGET = 512                       # output-tile rows  (multiple of 8)
_TN_TARGET = 512                       # output-tile cols  (multiple of 256)
_SMALL_PATH_MAX_BYTES = 8 * 1024 * 1024  # gridless single-block path


def _round_up(x, m):
    return ((x + m - 1) // m) * m


@functools.lru_cache(maxsize=None)
def _vmem_limit_bytes():
    """Generation-aware scoped-VMEM limit (v7x: 64 MiB/TC, v5e/v6e: 128 MiB)."""
    try:
        cap = int(getattr(pltpu.get_tpu_info(), "vmem_capacity_bytes"))
    except Exception:
        cap = 64 * 1024 * 1024  # conservative default (v7x per-core VMEM)
    # Leave ~25% headroom for compiler scratch / semaphores; cap at 100 MiB.
    return min((cap * 3) // 4, 100 * 1024 * 1024)


def _pick_k_tile(K, itemsize):
    """Choose the reduction tile.  Never pads in the wrapper:
       * small/medium K -> one full-K block (block == full dim is exempt from
         the 128-divisibility rule), so the k grid axis has a single step;
       * large K -> big fixed tile; the ragged tail is masked in-kernel."""
    full_k_max = 4096 if itemsize <= 2 else 2048
    if K <= full_k_max:
        return K, False
    tk = 2048 if itemsize <= 2 else 1024
    return tk, (K % tk) != 0


# ---------------------------------------------------------------------------
# Kernels
# ---------------------------------------------------------------------------
def _mm_bias_small_kernel(x_ref, w_ref, b_ref, o_ref):
    """Whole problem in one VMEM block: single MXU dot + bias."""
    acc = jnp.dot(x_ref[...], w_ref[...], preferred_element_type=jnp.float32)
    o_ref[...] = (acc + b_ref[...].astype(jnp.float32)).astype(o_ref.dtype)


def _make_tiled_kernel(K, tk, mask_k_tail, use_scratch):
    """Tiled kernel factory.

    The output BlockSpec ignores the k grid axis, so the accumulator (the
    output block itself for f32 outputs, an f32 scratch otherwise) stays
    resident in VMEM across all k steps.  Bias is folded into the k==0 init.
    When K % tk != 0, the ragged tail of the last k block is masked: both the
    x columns and W rows beyond K are zeroed so stale VMEM data (possibly
    NaN/Inf bit patterns) cannot contribute to the reduction.
    """

    def _body(x_ref, w_ref, b_ref, o_ref, acc_ref):
        k = pl.program_id(2)

        @pl.when(k == 0)
        def _init():
            acc_ref[...] = jnp.broadcast_to(
                b_ref[...].astype(jnp.float32), acc_ref.shape
            )

        x = x_ref[...]
        w = w_ref[...]
        if mask_k_tail:
            valid = K - k * tk  # >= tk for every step but the last
            col = jax.lax.broadcasted_iota(jnp.int32, x.shape, 1)
            row = jax.lax.broadcasted_iota(jnp.int32, w.shape, 0)
            x = jnp.where(col < valid, x, jnp.zeros_like(x))
            w = jnp.where(row < valid, w, jnp.zeros_like(w))

        acc_ref[...] += jnp.dot(x, w, preferred_element_type=jnp.float32)

        if use_scratch:
            @pl.when(k == pl.num_programs(2) - 1)
            def _finalize():
                o_ref[...] = acc_ref[...].astype(o_ref.dtype)

    if use_scratch:
        def kernel(x_ref, w_ref, b_ref, o_ref, acc_ref):
            _body(x_ref, w_ref, b_ref, o_ref, acc_ref)
    else:
        def kernel(x_ref, w_ref, b_ref, o_ref):
            _body(x_ref, w_ref, b_ref, o_ref, o_ref)

    return kernel


# ---------------------------------------------------------------------------
# Wrapper
# ---------------------------------------------------------------------------
def matmul_bias(x, w, b):
    *batch, K = x.shape
    K2, N = w.shape
    assert K == K2 and b.shape == (N,), (x.shape, w.shape, b.shape)

    out_dtype = x.dtype
    x2 = x.reshape(-1, K)
    M = x2.shape[0]
    b2 = b.reshape(1, N)

    itemsize = jnp.dtype(x.dtype).itemsize
    w_itemsize = jnp.dtype(w.dtype).itemsize
    out_itemsize = jnp.dtype(out_dtype).itemsize

    bytes_accessed = (itemsize * M * K + w_itemsize * K * N
                      + out_itemsize * M * N
                      + jnp.dtype(b.dtype).itemsize * N)
    cost = pl.CostEstimate(flops=2 * M * N * K, transcendentals=0,
                           bytes_accessed=bytes_accessed)

    # ---- small/medium problems: one gridless block, no pipeline overhead ---
    if bytes_accessed <= _SMALL_PATH_MAX_BYTES:
        out = pl.pallas_call(
            _mm_bias_small_kernel,
            out_shape=jax.ShapeDtypeStruct((M, N), out_dtype),
            in_specs=[pl.BlockSpec(memory_space=pltpu.MemorySpace.VMEM)] * 3,
            out_specs=pl.BlockSpec(memory_space=pltpu.MemorySpace.VMEM),
            cost_estimate=cost,
        )(x2, w, b2)
        return out.reshape(*batch, N)

    # ---- tiled MXU path -----------------------------------------------------
    tm = M if M <= _TM_TARGET else _TM_TARGET   # full dim or multiple of 8
    tn = N if N <= _TN_TARGET else _TN_TARGET   # full dim or multiple of 128

    # v7x has 2 TensorCores: keep >= 4 parallel (i, j) output tiles so the
    # "parallel" grid axes shard across both cores with some load balance.
    while tm > 128 and pl.cdiv(M, tm) * pl.cdiv(N, tn) < 4:
        tm = max(128, _round_up(tm // 2, 8))
    while tn > 256 and pl.cdiv(M, tm) * pl.cdiv(N, tn) < 4:
        tn = max(256, _round_up(tn // 2, 128))

    tk, mask_k_tail = _pick_k_tile(K, itemsize)
    grid = (pl.cdiv(M, tm), pl.cdiv(N, tn), pl.cdiv(K, tk))

    use_scratch = jnp.dtype(out_dtype) != jnp.dtype(jnp.float32)
    kernel = _make_tiled_kernel(K, tk, mask_k_tail, use_scratch)
    scratch = [pltpu.VMEM((tm, tn), jnp.float32)] if use_scratch else []

    # TODO(synk): on v5e consider pipeline_mode=pl.Buffered(3) on the W spec
    # if the per-step W DMA is exposed (lowest-HBM-BW generation).
    out = pl.pallas_call(
        kernel,
        out_shape=jax.ShapeDtypeStruct((M, N), out_dtype),
        grid_spec=pltpu.PrefetchScalarGridSpec(
            num_scalar_prefetch=0,
            grid=grid,
            in_specs=[
                pl.BlockSpec((tm, tk), lambda i, j, k: (i, k)),
                pl.BlockSpec((tk, tn), lambda i, j, k: (k, j)),
                pl.BlockSpec((1, tn), lambda i, j, k: (0, j)),
            ],
            out_specs=pl.BlockSpec((tm, tn), lambda i, j, k: (i, j)),
            scratch_shapes=scratch,
        ),
        compiler_params=pltpu.CompilerParams(
            dimension_semantics=("parallel", "parallel", "arbitrary"),
            vmem_limit_bytes=_vmem_limit_bytes(),
        ),
        cost_estimate=cost,
    )(x2, w, b2)
    return out.reshape(*batch, N)


# ---------------------------------------------------------------------------
# Self-test
# ---------------------------------------------------------------------------
if __name__ == "__main__":
    root = jax.random.PRNGKey(0)
    k1, k2, k3 = jax.random.split(root, 3)

    # 1) small module-scale shape (batch=2, seq=8, hidden=32 -> 64):
    #    gridless single-block path, 3-D batched input.
    kx, kw, kb = jax.random.split(k1, 3)
    x = jax.random.normal(kx, (2, 8, 32), dtype=jnp.float32)
    w = jax.random.normal(kw, (32, 64), dtype=jnp.float32) * 0.05
    b = jax.random.normal(kb, (64,), dtype=jnp.float32)
    out = matmul_bias(x, w, b)
    jax.block_until_ready(out)
    ref = jnp.einsum("bsk,kn->bsn", x, w) + b
    assert out.shape == ref.shape
    assert jnp.allclose(out, ref, atol=1e-3, rtol=1e-3), float(
        jnp.max(jnp.abs(out - ref)))

    # 2) larger f32 shape with ragged K (2100): tiled path, in-kernel K-tail
    #    masking, partial M/N output blocks, multi-step accumulation.
    kx, kw, kb = jax.random.split(k2, 3)
    x = jax.random.normal(kx, (512, 2100), dtype=jnp.float32)
    w = jax.random.normal(kw, (2100, 640), dtype=jnp.float32) * 0.05
    b = jax.random.normal(kb, (640,), dtype=jnp.float32)
    out = matmul_bias(x, w, b)
    jax.block_until_ready(out)
    ref = x @ w + b
    assert out.shape == ref.shape
    assert jnp.allclose(out, ref, atol=5e-2, rtol=5e-2), float(
        jnp.max(jnp.abs(out - ref)))

    # 3) bf16 inputs: tiled path with full-K single k step + f32 scratch acc.
    kx, kw, kb = jax.random.split(k3, 3)
    x = jax.random.normal(kx, (512, 2560), dtype=jnp.float32).astype(jnp.bfloat16)
    w = (jax.random.normal(kw, (2560, 1024), dtype=jnp.float32) * 0.05).astype(
        jnp.bfloat16)
    b = jax.random.normal(kb, (1024,), dtype=jnp.float32).astype(jnp.bfloat16)
    out = matmul_bias(x, w, b)
    jax.block_until_ready(out)
    ref = (x.astype(jnp.float32) @ w.astype(jnp.float32)
           + b.astype(jnp.float32))
    assert out.shape == ref.shape
    assert jnp.allclose(out.astype(jnp.float32), ref, atol=1e-1, rtol=1e-1), \
        float(jnp.max(jnp.abs(out.astype(jnp.float32) - ref)))

    print("KERNEL_OK")
</pallas_src>

<mosaic_0001>
module attributes {stable_mosaic.version = 11 : i64} {
  func.func @_mm_bias_small_kernel(%arg0: memref<16x32xf32, #tpu.memory_space<vmem>>, %arg1: memref<32x64xf32, #tpu.memory_space<vmem>>, %arg2: memref<1x64xf32, #tpu.memory_space<vmem>>, %arg3: memref<16x64xf32, #tpu.memory_space<vmem>>) attributes {dimension_semantics = [], scalar_prefetch = 0 : i64, scratch_operands = 0 : i64, tpu.core_type = #tpu.core_type<tc>} {
    %c0 = arith.constant 0 : index
    %c0_0 = arith.constant 0 : index
    %0 = vector.load %arg0[%c0, %c0_0] : memref<16x32xf32, #tpu.memory_space<vmem>>, vector<16x32xf32>
    %c0_1 = arith.constant 0 : index
    %c0_2 = arith.constant 0 : index
    %1 = vector.load %arg1[%c0_1, %c0_2] : memref<32x64xf32, #tpu.memory_space<vmem>>, vector<32x64xf32>
    %cst = arith.constant dense<0.000000e+00> : vector<16x64xf32>
    %2 = tpu.matmul %0, %1, %cst {dimension_numbers = #tpu.dot_dimension_numbers<[1], [0], [0], [1], [0, 0, 1, 1], [], []>} : vector<16x32xf32>, vector<32x64xf32>, vector<16x64xf32> -> vector<16x64xf32>
    %c0_3 = arith.constant 0 : index
    %c0_4 = arith.constant 0 : index
    %3 = vector.load %arg2[%c0_3, %c0_4] : memref<1x64xf32, #tpu.memory_space<vmem>>, vector<1x64xf32>
    %4 = vector.broadcast %3 : vector<1x64xf32> to vector<16x64xf32>
    %5 = arith.addf %2, %4 : vector<16x64xf32>
    %c0_5 = arith.constant 0 : index
    %c0_6 = arith.constant 0 : index
    %6 = vector.load %arg3[%c0_5, %c0_6] : memref<16x64xf32, #tpu.memory_space<vmem>>, vector<16x64xf32>
    tpu.vector_store %arg3[%c0_5, %c0_6], %5 {strides = array<i32>} : memref<16x64xf32, #tpu.memory_space<vmem>>, vector<16x64xf32>,
    return
  }
}

</mosaic_0001>

<llo_original>
// kernel: tpu_custom_call.1
$region0: #{tpu_custom_call.1}
  #allocation0 [shape = 'u32[]', space=smem, size = 0x4, offset = 0x4, fixed_abs, tag = 'smem constant byte address 0x4 - core index']
  #allocation1 [shape = 'u32[144,128]{1,0:T(1,128)}', space=vmem, size = 0x12000, scoped, tag = 'internal scratch']
  %s0 = inlined_call_operand.hbm [shape: f32[16,32], index: 0, kind: input, shape index: {}]
  %s1 = inlined_call_operand.hbm [shape: f32[32,64], index: 1, kind: input, shape index: {}]
  %s2 = inlined_call_operand.vmem [shape: f32[1,64], index: 2, kind: input, shape index: {}]
  %s3 = inlined_call_operand.hbm [shape: f32[16,64], index: 3, kind: output, shape index: {}]
  %s4 = sld [smem:[#allocation0]]
  $region30: #{tpu_custom_call.1} parent=0
    _
  %s6 = ssub.s32 1, %s4
  %s7 = scalar_select 0, %s6, %s4
  $region1: #{tpu_custom_call.1} parent=0
    #allocation2 [shape = 'u8[8192]{0}', space=vmem, size = 0x2000, scoped, tag = 'input window, operand 0, single buffered']
    #allocation3 [shape = 's32[1]{0}', space=sflag, size = 0x4, scoped, tag = 'scoped memory for tpu_custom_call.1']
    #allocation4 [shape = 's32[1]{0}', space=sflag, size = 0x4, scoped, tag = 'scoped memory for tpu_custom_call.1']
    #allocation5 [shape = 'u8[16384]{0}', space=vmem, size = 0x4000, scoped, tag = 'input window, operand 1, single buffered']
    #allocation6 [shape = 's32[1]{0}', space=sflag, size = 0x4, scoped, tag = 'scoped memory for tpu_custom_call.1']
    #allocation7 [shape = 'u8[8192]{0}', space=vmem, size = 0x2000, scoped, tag = 'output window, operand 0, single buffered']
    %8 = vsyncpa [#allocation3], 0
    %9 = vsyncpa [#allocation6], 0
    %10 = vsyncpa [#allocation4], 0
    // Predicated region
    $region2: #{tpu_custom_call.1} parent=1 // pred_check
      _
    $region3: #{tpu_custom_call.1} parent=1 // pred_check_branch
      %12 = sbr.rel (0) target = $region5
    $region4: #{tpu_custom_call.1} parent=1 // pred_region
      %s14 = ssub.s32 256, 256
      %15 = vsyncadd [#allocation3], %s14
      %s16 = sshll.u32 [#allocation2], 4
      %s17 = int_to_ptr.vmem [resolvable:$true] %s16
      %22 = dma.hbm_to_vmem [thread:$0]  %s0, 256, %s17, [#allocation3], 128, 128, 8
    $region5: #{tpu_custom_call.1} parent=1 // pred_fallthru
      _
    // Predicated region
    $region6: #{tpu_custom_call.1} parent=1 // pred_check
      _
    $region7: #{tpu_custom_call.1} parent=1 // pred_check_branch
      %24 = sbr.rel (0) target = $region9
    $region8: #{tpu_custom_call.1} parent=1 // pred_region
      %s26 = ssub.s32 512, 512
      %27 = vsyncadd [#allocation6], %s26
      %s28 = sshll.u32 [#allocation5], 4
      %s29 = int_to_ptr.vmem [resolvable:$true] %s28
      %34 = dma.hbm_to_vmem [thread:$0]  %s1, 512, %s29, [#allocation6], 128, 128, 8
    $region9: #{tpu_custom_call.1} parent=1 // pred_fallthru
      _
    // Predicated region
    $region10: #{tpu_custom_call.1} parent=1 // pred_check
      _
    $region11: #{tpu_custom_call.1} parent=1 // pred_check_branch
      %36 = sbr.rel (0) target = $region13
    $region12: #{tpu_custom_call.1} parent=1 // pred_region
      _
    $region13: #{tpu_custom_call.1} parent=1 // pred_fallthru
      _
    // Predicated region
    $region14: #{tpu_custom_call.1} parent=1 // pred_check
      _
    $region15: #{tpu_custom_call.1} parent=1 // pred_check_branch
      %38 = sbr.rel (0) target = $region17
    $region16: #{tpu_custom_call.1} parent=1 // pred_region
      %39 = dma.done [#allocation3], 256
    $region17: #{tpu_custom_call.1} parent=1 // pred_fallthru
      _
    // Predicated region
    $region18: #{tpu_custom_call.1} parent=1 // pred_check
      _
    $region19: #{tpu_custom_call.1} parent=1 // pred_check_branch
      %41 = sbr.rel (0) target = $region21
    $region20: #{tpu_custom_call.1} parent=1 // pred_region
      %42 = dma.done [#allocation6], 512
    $region21: #{tpu_custom_call.1} parent=1 // pred_fallthru
      _
    %v43 = vld [vmem:[#allocation2] sm:$0xff]
    %v44 = vld [vmem:[#allocation2 + $0x8] sm:$0xff]
    %v45 = vld [vmem:[#allocation5] sm:$0xff]
    %v46 = vld [vmem:[#allocation5 + $0x8] sm:$0xff]
    %v47 = vld [vmem:[#allocation5 + $0x10] sm:$0xff]
    %v48 = vld [vmem:[#allocation5 + $0x18] sm:$0xff]
    %v49 = vld [vmem:[%s2] sm:$0x1]
    %v51 = vlaneseq
    %v52 = vshrl.u32 %v51, 7
    %v53 = vsub.s32 0, %v52
    %v54 = vrot.slane %v49, %v53
    %vm56 = vcmask 261120
    %v58 = vsel %vm56, %v43, 0
    %v61 = vsel %vm56, %v44, 0
    %63 = vmatprep.subr.mxu0 0.0
    %64 = vmatpush1.msra.mxu0 0.0
    %65 = vmatprep.subr.mxu0 0.0
    %66 = vmatpush1.msra.mxu0 0.0
    %67 = vmatprep.subr.mxu0 0.0
    %68 = vmatpush1.msra.mxu0 0.0
    %69 = vmatprep.subr.mxu0 0.0
    %70 = vmatpush1.msra.mxu0 0.0
    %71 = vmatprep.subr.mxu0 0.0
    %72 = vmatpush1.msra.mxu0 0.0
    %73 = vmatprep.subr.mxu0 0.0
    %74 = vmatpush1.msra.mxu0 0.0
    %75 = vmatprep.subr.mxu0 0.0
    %76 = vmatpush1.msra.mxu0 0.0
    %77 = vmatprep.subr.mxu0 0.0
    %78 = vmatpush1.msra.mxu0 0.0
    %79 = vmatprep.subr.mxu0 0.0
    %80 = vmatpush1.msra.mxu0 0.0
    %81 = vmatprep.subr.mxu0 0.0
    %82 = vmatpush1.msra.mxu0 0.0
    %83 = vmatprep.subr.mxu0 0.0
    %84 = vmatpush1.msra.mxu0 0.0
    %85 = vmatprep.subr.mxu0 0.0
    %86 = vmatpush1.msra.mxu0 0.0
    %87 = vmatprep.subr.mxu0 0.0
    %88 = vmatpush1.msra.mxu0 %v48
    %89 = vmatprep.subr.mxu0 0.0
    %90 = vmatpush1.msra.mxu0 %v47
    %91 = vmatprep.subr.mxu0 0.0
    %92 = vmatpush1.msra.mxu0 %v46
    %93 = vmatprep.subr.mxu0 0.0
    %94 = vmatpush1.msra.mxu0 %v45
    %95 = vmatprep.subr.mxu0 0.0
    %96 = vmatpush2.msra.mxu0 0.0
    %97 = vmatprep.subr.mxu0 0.0
    %98 = vmatpush2.msra.mxu0 0.0
    %99 = vmatprep.subr.mxu0 0.0
    %100 = vmatpush2.msra.mxu0 0.0
    %101 = vmatprep.subr.mxu0 0.0
    %102 = vmatpush2.msra.mxu0 0.0
    %103 = vmatprep.subr.mxu0 0.0
    %104 = vmatpush2.msra.mxu0 0.0
    %105 = vmatprep.subr.mxu0 0.0
    %106 = vmatpush2.msra.mxu0 0.0
    %107 = vmatprep.subr.mxu0 0.0
    %108 = vmatpush2.msra.mxu0 0.0
    %109 = vmatprep.subr.mxu0 0.0
    %110 = vmatpush2.msra.mxu0 0.0
    %111 = vmatprep.subr.mxu0 0.0
    %112 = vmatpush2.msra.mxu0 0.0
    %113 = vmatprep.subr.mxu0 0.0
    %114 = vmatpush2.msra.mxu0 0.0
    %115 = vmatprep.subr.mxu0 0.0
    %116 = vmatpush2.msra.mxu0 0.0
    %117 = vmatprep.subr.mxu0 0.0
    %118 = vmatpush2.msra.mxu0 0.0
    %119 = vmatprep.subr.mxu0 0.0
    %120 = vmatpush2.msra.mxu0 0.0
    %121 = vmatprep.subr.mxu0 0.0
    %122 = vmatpush2.msra.mxu0 0.0
    %123 = vmatprep.subr.mxu0 0.0
    %124 = vmatpush2.msra.mxu0 0.0
    %125 = vmatprep.subr.mxu0 0.0
    %126 = vmatpush2.msra.mxu0 0.0
    %127 = vmatprep.mubr.f32.mxu0 0.0
    %128 = vmatmul.mubr.f32.gmra.mxu0 %v58
    %v129 = vpop.f32.mrf.mxu0
    %v130 = vadd.f32 %v54, %v129
    %v131 = vpop.f32.mrf.mxu0
    %132 = vmatprep.mubr.f32.mxu0 0.0
    %133 = vmatmul.mubr.f32.gmra.mxu0 %v61
    %v134 = vpop.f32.mrf.mxu0
    %v135 = vadd.f32 %v54, %v134
    %v136 = vpop.f32.mrf.mxu0
    %137 = vdwg.mxu0
    %vm138 = vcmask 523264
    %139 = vst.msk [vmem:[#allocation7] sm:$0xff] %vm138, %v130
    %140 = vst.msk [vmem:[#allocation7 + $0x8] sm:$0xff] %vm138, %v135
    // Predicated region
    $region22: #{tpu_custom_call.1} parent=1 // pred_check
      _
    $region23: #{tpu_custom_call.1} parent=1 // pred_check_branch
      %142 = sbr.rel (0) target = $region25
    $region24: #{tpu_custom_call.1} parent=1 // pred_region
      %s144 = ssub.s32 256, 256
      %145 = vsyncadd [#allocation4], %s144
      %s146 = sshll.u32 [#allocation7], 4
      %s147 = int_to_ptr.vmem [resolvable:$true] %s146
      %152 = dma.vmem_to_hbm [thread:$0]  %s147, 256, %s3, [#allocation4], 128, 128, 8
    $region25: #{tpu_custom_call.1} parent=1 // pred_fallthru
      _
    // Predicated region
    $region26: #{tpu_custom_call.1} parent=1 // pred_check
      _
    $region27: #{tpu_custom_call.1} parent=1 // pred_check_branch
      %154 = sbr.rel (0) target = $region29
    $region28: #{tpu_custom_call.1} parent=1 // pred_region
      %155 = dma.done [#allocation4], 256
    $region29: #{tpu_custom_call.1} parent=1 // pred_fallthru
      _
    %156 = vsyncpa [#allocation3], 1
    %157 = vsyncpa [#allocation6], 1
    %158 = vsyncpa [#allocation4], 1

</llo_original>
